<compile_context>
chip_gen: v7x
topology: tpu7x:2x2x1
jax: 0.10.0
libtpu: 0.0.40
codegen_flags: <defaults>
</compile_context>

<pallas_src>
import functools

import jax
import jax.numpy as jnp
from jax.experimental import pallas as pl
from jax.experimental.pallas import tpu as pltpu


def _round_up(x, m):
    return ((x + m - 1) // m) * m


def _mlp_value_kernel(obs_ref, act_ref,
                      w1o_ref, w1a_ref, b1_ref,
                      w2_ref, b2_ref,
                      w3_ref, b3_ref,
                      w4_ref, b4_ref,
                      out_ref):
    bf16 = jnp.bfloat16

    # Layer 1: split-K matmul fuses the (obs, act) concat. bf16 in, f32 acc.
    h1 = jnp.dot(obs_ref[...].astype(bf16), w1o_ref[...],
                 preferred_element_type=jnp.float32)
    h1 = h1 + jnp.dot(act_ref[...].astype(bf16), w1a_ref[...],
                      preferred_element_type=jnp.float32)
    h1 = jnp.maximum(h1 + b1_ref[...], 0.0)

    # Layer 2
    h2 = jnp.dot(h1.astype(bf16), w2_ref[...],
                 preferred_element_type=jnp.float32)
    h2 = jnp.maximum(h2 + b2_ref[...], 0.0)

    # Layer 3
    h3 = jnp.dot(h2.astype(bf16), w3_ref[...],
                 preferred_element_type=jnp.float32)
    h3 = jnp.maximum(h3 + b3_ref[...], 0.0)

    # Layer 4 (out_features = 1): VPU multiply + lane reduction instead of an
    # MXU matmul that would use 1/256 of the output lanes. f32 throughout.
    q = jnp.sum(h3 * w4_ref[...], axis=-1, keepdims=True) + b4_ref[0, 0]
    out_ref[...] = q.astype(out_ref.dtype)


def mlp_value_forward(obs, acts, params, *, tb_max=1024):
    """Fused forward of the DDPG critic.

    obs:  [B, obs_dim] float32
    acts: [B, act_dim] float32
    params: f32 weights stored as [in, out] (transposed vs. PyTorch) + biases.
    returns q: [B, 1] float32
    """
    w1, b1, w2, b2, w3, b3, w4, b4 = params
    B, obs_dim = obs.shape
    act_dim = acts.shape[1]

    # bf16 MXU operands (f32 accumulation in-kernel); split W1 to fuse concat.
    w1o = w1[:obs_dim].astype(jnp.bfloat16)
    w1a = w1[obs_dim:].astype(jnp.bfloat16)
    w2b = w2.astype(jnp.bfloat16)
    w3b = w3.astype(jnp.bfloat16)
    w4row = w4.reshape(1, -1)                      # (1, 256), stays f32 (VPU)

    # Batch tile: multiple of 8 sublanes, capped so intermediates + double
    # buffers fit the default scoped VMEM on every generation (v7x 64 MiB).
    tb = min(tb_max, _round_up(B, 8))
    b_pad = _round_up(B, tb)
    if b_pad != B:
        pad = b_pad - B
        obs = jnp.pad(obs, ((0, pad), (0, 0)))
        acts = jnp.pad(acts, ((0, pad), (0, 0)))

    def row_spec(cols):
        return pl.BlockSpec((tb, cols), lambda i: (i, 0))

    def resident(shape):
        return pl.BlockSpec(shape, lambda i, _n=len(shape): (0,) * _n)

    q = pl.pallas_call(
        _mlp_value_kernel,
        out_shape=jax.ShapeDtypeStruct((b_pad, 1), jnp.float32),
        grid=(b_pad // tb,),
        in_specs=[
            row_spec(obs_dim),
            row_spec(act_dim),
            resident(w1o.shape), resident(w1a.shape), resident(b1.shape),
            resident(w2b.shape), resident(b2.shape),
            resident(w3b.shape), resident(b3.shape),
            resident(w4row.shape),
            pl.BlockSpec(memory_space=pltpu.MemorySpace.SMEM),   # b4 scalar
        ],
        out_specs=row_spec(1),
        compiler_params=pltpu.CompilerParams(
            dimension_semantics=("parallel",)),
    )(obs, acts, w1o, w1a, b1, w2b, b2, w3b, b3, w4row, b4)

    return q[:B]


def _xavier_uniform(key, fan_in, fan_out):
    # Matches torch.nn.init.xavier_uniform_: U(-a, a), a = sqrt(6/(fan_in+fan_out)).
    bound = jnp.sqrt(6.0 / (fan_in + fan_out))
    # Stored [in, out]; the xavier bound is symmetric in fan_in/fan_out so the
    # distribution matches PyTorch's [out, in] storage.
    return jax.random.uniform(key, (fan_in, fan_out), jnp.float32, -bound, bound)


def init_mlp_value_params(key, obs_dim, act_dim):
    k1, k2, k3, k4 = jax.random.split(key, 4)
    in_dim = obs_dim + act_dim
    w1 = _xavier_uniform(k1, in_dim, 256)
    w2 = _xavier_uniform(k2, 256, 256)
    w3 = _xavier_uniform(k3, 256, 256)
    w4 = _xavier_uniform(k4, 256, 1)
    b1 = jnp.zeros((1, 256), jnp.float32)
    b2 = jnp.zeros((1, 256), jnp.float32)
    b3 = jnp.zeros((1, 256), jnp.float32)
    b4 = jnp.zeros((1, 1), jnp.float32)
    return (w1, b1, w2, b2, w3, b3, w4, b4)


def _reference_forward(obs, acts, params):
    # Mirrors the kernel's numerics: bf16 matmul inputs, f32 accumulation,
    # f32 bias/ReLU, f32 final layer.
    w1, b1, w2, b2, w3, b3, w4, b4 = params
    bf16 = jnp.bfloat16
    x = jnp.concatenate([obs, acts], axis=1)
    h = jnp.dot(x.astype(bf16), w1.astype(bf16),
                preferred_element_type=jnp.float32) + b1
    h = jnp.maximum(h, 0.0)
    h = jnp.dot(h.astype(bf16), w2.astype(bf16),
                preferred_element_type=jnp.float32) + b2
    h = jnp.maximum(h, 0.0)
    h = jnp.dot(h.astype(bf16), w3.astype(bf16),
                preferred_element_type=jnp.float32) + b3
    h = jnp.maximum(h, 0.0)
    return h @ w4 + b4


if __name__ == "__main__":
    key = jax.random.PRNGKey(0)
    k_param, k_obs, k_act = jax.random.split(key, 3)

    batch = 2
    obs_dim = 16
    act_dim = 8

    params = init_mlp_value_params(k_param, obs_dim, act_dim)
    obs = jax.random.normal(k_obs, (batch, obs_dim), jnp.float32)
    acts = jax.random.normal(k_act, (batch, act_dim), jnp.float32)

    fwd = jax.jit(functools.partial(mlp_value_forward, tb_max=1024))
    q = fwd(obs, acts, params)
    q = jax.block_until_ready(q)

    q_ref = _reference_forward(obs, acts, params)
    assert q.shape == (batch, 1)
    assert jnp.allclose(q, q_ref, atol=1e-3, rtol=1e-3), "mismatch vs reference"

    print("KERNEL_OK")
</pallas_src>

<mosaic_0001>
module attributes {stable_mosaic.version = 11 : i64} {
  func.func @_mlp_value_kernel(%arg0: i32, %arg1: memref<8x16xf32, #tpu.memory_space<vmem>>, %arg2: memref<8x8xf32, #tpu.memory_space<vmem>>, %arg3: memref<16x256xbf16, #tpu.memory_space<vmem>>, %arg4: memref<8x256xbf16, #tpu.memory_space<vmem>>, %arg5: memref<1x256xf32, #tpu.memory_space<vmem>>, %arg6: memref<256x256xbf16, #tpu.memory_space<vmem>>, %arg7: memref<1x256xf32, #tpu.memory_space<vmem>>, %arg8: memref<256x256xbf16, #tpu.memory_space<vmem>>, %arg9: memref<1x256xf32, #tpu.memory_space<vmem>>, %arg10: memref<1x256xf32, #tpu.memory_space<vmem>>, %arg11: memref<1x1xf32, #tpu.memory_space<smem>>, %arg12: memref<8x1xf32, #tpu.memory_space<vmem>>) attributes {dimension_semantics = [#tpu.dimension_semantics<parallel>], iteration_bounds = array<i64: 1>, scalar_prefetch = 0 : i64, scratch_operands = 0 : i64, tpu.core_type = #tpu.core_type<tc>, window_params = [{transform_indices = @transform_0, window_bounds = array<i64: 8, 16>}, {transform_indices = @transform_1, window_bounds = array<i64: 8, 8>}, {pipeline_mode = #tpu.pipeline_mode<synchronous>, transform_indices = @transform_2, window_bounds = array<i64: 16, 256>}, {pipeline_mode = #tpu.pipeline_mode<synchronous>, transform_indices = @transform_3, window_bounds = array<i64: 8, 256>}, {pipeline_mode = #tpu.pipeline_mode<synchronous>, transform_indices = @transform_4, window_bounds = array<i64: 1, 256>}, {pipeline_mode = #tpu.pipeline_mode<synchronous>, transform_indices = @transform_5, window_bounds = array<i64: 256, 256>}, {pipeline_mode = #tpu.pipeline_mode<synchronous>, transform_indices = @transform_6, window_bounds = array<i64: 1, 256>}, {pipeline_mode = #tpu.pipeline_mode<synchronous>, transform_indices = @transform_7, window_bounds = array<i64: 256, 256>}, {pipeline_mode = #tpu.pipeline_mode<synchronous>, transform_indices = @transform_8, window_bounds = array<i64: 1, 256>}, {pipeline_mode = #tpu.pipeline_mode<synchronous>, transform_indices = @transform_9, window_bounds = array<i64: 1, 256>}, {transform_indices = @transform_10, window_bounds = array<i64: 1, 1>}, {transform_indices = @transform_11, window_bounds = array<i64: 8, 1>}]} {
    %c0 = arith.constant 0 : index
    %c0_0 = arith.constant 0 : index
    %0 = vector.load %arg1[%c0, %c0_0] : memref<8x16xf32, #tpu.memory_space<vmem>>, vector<8x16xf32>
    %1 = arith.truncf %0 : vector<8x16xf32> to vector<8x16xbf16>
    %c0_1 = arith.constant 0 : index
    %c0_2 = arith.constant 0 : index
    %2 = vector.load %arg3[%c0_1, %c0_2] : memref<16x256xbf16, #tpu.memory_space<vmem>>, vector<16x256xbf16>
    %cst = arith.constant dense<0.000000e+00> : vector<8x256xf32>
    %3 = tpu.matmul %1, %2, %cst {dimension_numbers = #tpu.dot_dimension_numbers<[1], [0], [0], [1], [0, 0, 1, 1], [], []>} : vector<8x16xbf16>, vector<16x256xbf16>, vector<8x256xf32> -> vector<8x256xf32>
    %c0_3 = arith.constant 0 : index
    %c0_4 = arith.constant 0 : index
    %4 = vector.load %arg2[%c0_3, %c0_4] : memref<8x8xf32, #tpu.memory_space<vmem>>, vector<8x8xf32>
    %5 = arith.truncf %4 : vector<8x8xf32> to vector<8x8xbf16>
    %c0_5 = arith.constant 0 : index
    %c0_6 = arith.constant 0 : index
    %6 = vector.load %arg4[%c0_5, %c0_6] : memref<8x256xbf16, #tpu.memory_space<vmem>>, vector<8x256xbf16>
    %cst_7 = arith.constant dense<0.000000e+00> : vector<8x256xf32>
    %7 = tpu.matmul %5, %6, %cst_7 {dimension_numbers = #tpu.dot_dimension_numbers<[1], [0], [0], [1], [0, 0, 1, 1], [], []>} : vector<8x8xbf16>, vector<8x256xbf16>, vector<8x256xf32> -> vector<8x256xf32>
    %8 = arith.addf %3, %7 : vector<8x256xf32>
    %c0_8 = arith.constant 0 : index
    %c0_9 = arith.constant 0 : index
    %9 = vector.load %arg5[%c0_8, %c0_9] : memref<1x256xf32, #tpu.memory_space<vmem>>, vector<1x256xf32>
    %10 = vector.broadcast %9 : vector<1x256xf32> to vector<8x256xf32>
    %11 = arith.addf %8, %10 : vector<8x256xf32>
    %cst_10 = arith.constant 0.000000e+00 : f32
    %12 = vector.broadcast %cst_10 : f32 to vector<8x256xf32>
    %13 = arith.maximumf %11, %12 : vector<8x256xf32>
    %14 = arith.truncf %13 : vector<8x256xf32> to vector<8x256xbf16>
    %c0_11 = arith.constant 0 : index
    %c0_12 = arith.constant 0 : index
    %15 = vector.load %arg6[%c0_11, %c0_12] : memref<256x256xbf16, #tpu.memory_space<vmem>>, vector<256x256xbf16>
    %cst_13 = arith.constant dense<0.000000e+00> : vector<8x256xf32>
    %16 = tpu.matmul %14, %15, %cst_13 {dimension_numbers = #tpu.dot_dimension_numbers<[1], [0], [0], [1], [0, 0, 1, 1], [], []>} : vector<8x256xbf16>, vector<256x256xbf16>, vector<8x256xf32> -> vector<8x256xf32>
    %c0_14 = arith.constant 0 : index
    %c0_15 = arith.constant 0 : index
    %17 = vector.load %arg7[%c0_14, %c0_15] : memref<1x256xf32, #tpu.memory_space<vmem>>, vector<1x256xf32>
    %18 = vector.broadcast %17 : vector<1x256xf32> to vector<8x256xf32>
    %19 = arith.addf %16, %18 : vector<8x256xf32>
    %cst_16 = arith.constant 0.000000e+00 : f32
    %20 = vector.broadcast %cst_16 : f32 to vector<8x256xf32>
    %21 = arith.maximumf %19, %20 : vector<8x256xf32>
    %22 = arith.truncf %21 : vector<8x256xf32> to vector<8x256xbf16>
    %c0_17 = arith.constant 0 : index
    %c0_18 = arith.constant 0 : index
    %23 = vector.load %arg8[%c0_17, %c0_18] : memref<256x256xbf16, #tpu.memory_space<vmem>>, vector<256x256xbf16>
    %cst_19 = arith.constant dense<0.000000e+00> : vector<8x256xf32>
    %24 = tpu.matmul %22, %23, %cst_19 {dimension_numbers = #tpu.dot_dimension_numbers<[1], [0], [0], [1], [0, 0, 1, 1], [], []>} : vector<8x256xbf16>, vector<256x256xbf16>, vector<8x256xf32> -> vector<8x256xf32>
    %c0_20 = arith.constant 0 : index
    %c0_21 = arith.constant 0 : index
    %25 = vector.load %arg9[%c0_20, %c0_21] : memref<1x256xf32, #tpu.memory_space<vmem>>, vector<1x256xf32>
    %26 = vector.broadcast %25 : vector<1x256xf32> to vector<8x256xf32>
    %27 = arith.addf %24, %26 : vector<8x256xf32>
    %cst_22 = arith.constant 0.000000e+00 : f32
    %28 = vector.broadcast %cst_22 : f32 to vector<8x256xf32>
    %29 = arith.maximumf %27, %28 : vector<8x256xf32>
    %c0_23 = arith.constant 0 : index
    %c0_24 = arith.constant 0 : index
    %30 = vector.load %arg10[%c0_23, %c0_24] : memref<1x256xf32, #tpu.memory_space<vmem>>, vector<1x256xf32>
    %31 = vector.broadcast %30 : vector<1x256xf32> to vector<8x256xf32>
    %32 = arith.mulf %29, %31 : vector<8x256xf32>
    %cst_25 = arith.constant dense<0.000000e+00> : vector<8xf32>
    %33 = vector.multi_reduction <add>, %32, %cst_25 [1] : vector<8x256xf32> to vector<8xf32>
    %34 = vector.shape_cast %33 : vector<8xf32> to vector<8x1xf32>
    %c0_26 = arith.constant 0 : index
    %c0_27 = arith.constant 0 : index
    %35 = memref.load %arg11[%c0_26, %c0_27] : memref<1x1xf32, #tpu.memory_space<smem>>
    %36 = vector.broadcast %35 : f32 to vector<8x1xf32>
    %37 = arith.addf %34, %36 : vector<8x1xf32>
    %c0_28 = arith.constant 0 : index
    %c0_29 = arith.constant 0 : index
    %38 = vector.load %arg12[%c0_28, %c0_29] : memref<8x1xf32, #tpu.memory_space<vmem>>, vector<8x1xf32>
    tpu.vector_store %arg12[%c0_28, %c0_29], %37 {strides = array<i32>} : memref<8x1xf32, #tpu.memory_space<vmem>>, vector<8x1xf32>,
    return
  }
  func.func @transform_0(%arg0: i32) -> (i32, i32) {
    %c0_i32 = arith.constant 0 : i32
    %c0_i32_0 = arith.constant 0 : i32
    return %arg0, %c0_i32 : i32, i32
  }
  func.func @transform_1(%arg0: i32) -> (i32, i32) {
    %c0_i32 = arith.constant 0 : i32
    %c0_i32_0 = arith.constant 0 : i32
    return %arg0, %c0_i32 : i32, i32
  }
  func.func @transform_2(%arg0: i32) -> (i32, i32) {
    %c0_i32 = arith.constant 0 : i32
    %c0_i32_0 = arith.constant 0 : i32
    %c0_i32_1 = arith.constant 0 : i32
    return %c0_i32, %c0_i32_0 : i32, i32
  }
  func.func @transform_3(%arg0: i32) -> (i32, i32) {
    %c0_i32 = arith.constant 0 : i32
    %c0_i32_0 = arith.constant 0 : i32
    %c0_i32_1 = arith.constant 0 : i32
    return %c0_i32, %c0_i32_0 : i32, i32
  }
  func.func @transform_4(%arg0: i32) -> (i32, i32) {
    %c0_i32 = arith.constant 0 : i32
    %c0_i32_0 = arith.constant 0 : i32
    %c0_i32_1 = arith.constant 0 : i32
    return %c0_i32, %c0_i32_0 : i32, i32
  }
  func.func @transform_5(%arg0: i32) -> (i32, i32) {
    %c0_i32 = arith.constant 0 : i32
    %c0_i32_0 = arith.constant 0 : i32
    %c0_i32_1 = arith.constant 0 : i32
    return %c0_i32, %c0_i32_0 : i32, i32
  }
  func.func @transform_6(%arg0: i32) -> (i32, i32) {
    %c0_i32 = arith.constant 0 : i32
    %c0_i32_0 = arith.constant 0 : i32
    %c0_i32_1 = arith.constant 0 : i32
    return %c0_i32, %c0_i32_0 : i32, i32
  }
  func.func @transform_7(%arg0: i32) -> (i32, i32) {
    %c0_i32 = arith.constant 0 : i32
    %c0_i32_0 = arith.constant 0 : i32
    %c0_i32_1 = arith.constant 0 : i32
    return %c0_i32, %c0_i32_0 : i32, i32
  }
  func.func @transform_8(%arg0: i32) -> (i32, i32) {
    %c0_i32 = arith.constant 0 : i32
    %c0_i32_0 = arith.constant 0 : i32
    %c0_i32_1 = arith.constant 0 : i32
    return %c0_i32, %c0_i32_0 : i32, i32
  }
  func.func @transform_9(%arg0: i32) -> (i32, i32) {
    %c0_i32 = arith.constant 0 : i32
    %c0_i32_0 = arith.constant 0 : i32
    %c0_i32_1 = arith.constant 0 : i32
    return %c0_i32, %c0_i32_0 : i32, i32
  }
  func.func @transform_10(%arg0: i32) -> (i32, i32) {
    %c0_i32 = arith.constant 0 : i32
    %c0_i32_0 = arith.constant 0 : i32
    %c0_i32_1 = arith.constant 0 : i32
    return %c0_i32, %c0_i32_0 : i32, i32
  }
  func.func @transform_11(%arg0: i32) -> (i32, i32) {
    %c0_i32 = arith.constant 0 : i32
    %c0_i32_0 = arith.constant 0 : i32
    return %arg0, %c0_i32 : i32, i32
  }
}

</mosaic_0001>

<llo_original>
// kernel: mlp_value_forward.1
$region0: #{mlp_value_forward.1}
  #allocation0 [shape = 'u32[]', space=smem, size = 0x4, offset = 0x4, fixed_abs, tag = 'smem constant byte address 0x4 - core index']
  #allocation1 [shape = 'u32[144,128]{1,0:T(1,128)}', space=vmem, size = 0x12000, scoped, tag = 'internal scratch']
  #allocation2 [shape = 'f32[1,1]{1,0:T(1,128)S(6)}', space=smem, size = 0x200, scoped, tag = 'scoped memory for mlp_value_forward.1']
  %s0 = inlined_call_operand.vmem [shape: f32[8,16], index: 0, kind: input, shape index: {}]
  %s1 = inlined_call_operand.vmem [shape: f32[8,8], index: 1, kind: input, shape index: {}]
  %s2 = inlined_call_operand.vmem [shape: bf16[16,256], index: 2, kind: input, shape index: {}]
  %s3 = inlined_call_operand.vmem [shape: bf16[8,256], index: 3, kind: input, shape index: {}]
  %s4 = inlined_call_operand.vmem [shape: f32[1,256], index: 4, kind: input, shape index: {}]
  %s5 = inlined_call_operand.vmem [shape: bf16[256,256], index: 5, kind: input, shape index: {}]
  %s6 = inlined_call_operand.vmem [shape: f32[1,256], index: 6, kind: input, shape index: {}]
  %s7 = inlined_call_operand.vmem [shape: bf16[256,256], index: 7, kind: input, shape index: {}]
  %s8 = inlined_call_operand.vmem [shape: f32[1,256], index: 8, kind: input, shape index: {}]
  %s9 = inlined_call_operand.vmem [shape: f32[1,256], index: 9, kind: input, shape index: {}]
  %s10 = inlined_call_operand.<no memory space> [shape: f32[1,1], index: 10, kind: input, shape index: {}]
  %s11 = inlined_call_operand.vmem [shape: f32[8,1], index: 11, kind: output, shape index: {}]
  %s12 = sld [smem:[#allocation0]]
  $region54: #{mlp_value_forward.1} parent=0
    _
  %s14 = ssub.s32 1, %s12
  %s15 = scalar_select 0, %s14, %s12
  %16 = sst [smem:[#allocation2]] %s10
  // Predicated region
  $region2: #{mlp_value_forward.1} parent=0 // pred_check
    _
  $region3: #{mlp_value_forward.1} parent=0 // pred_check_branch
    %18 = sbr.rel (0) target = $region5
  $region4: #{mlp_value_forward.1} parent=0 // pred_region
    _
  $region5: #{mlp_value_forward.1} parent=0 // pred_fallthru
    _
  // Predicated region
  $region6: #{mlp_value_forward.1} parent=0 // pred_check
    _
  $region7: #{mlp_value_forward.1} parent=0 // pred_check_branch
    %20 = sbr.rel (0) target = $region9
  $region8: #{mlp_value_forward.1} parent=0 // pred_region
    _
  $region9: #{mlp_value_forward.1} parent=0 // pred_fallthru
    _
  // Predicated region
  $region10: #{mlp_value_forward.1} parent=0 // pred_check
    _
  $region11: #{mlp_value_forward.1} parent=0 // pred_check_branch
    %22 = sbr.rel (0) target = $region13
  $region12: #{mlp_value_forward.1} parent=0 // pred_region
    _
  $region13: #{mlp_value_forward.1} parent=0 // pred_fallthru
    _
  // Predicated region
  $region14: #{mlp_value_forward.1} parent=0 // pred_check
    _
  $region15: #{mlp_value_forward.1} parent=0 // pred_check_branch
    %24 = sbr.rel (0) target = $region17
  $region16: #{mlp_value_forward.1} parent=0 // pred_region
    _
  $region17: #{mlp_value_forward.1} parent=0 // pred_fallthru
    _
  // Predicated region
  $region18: #{mlp_value_forward.1} parent=0 // pred_check
    _
  $region19: #{mlp_value_forward.1} parent=0 // pred_check_branch
    %26 = sbr.rel (0) target = $region21
  $region20: #{mlp_value_forward.1} parent=0 // pred_region
    _
  $region21: #{mlp_value_forward.1} parent=0 // pred_fallthru
    _
  // Predicated region
  $region22: #{mlp_value_forward.1} parent=0 // pred_check
    _
  $region23: #{mlp_value_forward.1} parent=0 // pred_check_branch
    %28 = sbr.rel (0) target = $region25
  $region24: #{mlp_value_forward.1} parent=0 // pred_region
    _
  $region25: #{mlp_value_forward.1} parent=0 // pred_fallthru
    _
  // Predicated region
  $region26: #{mlp_value_forward.1} parent=0 // pred_check
    _
  $region27: #{mlp_value_forward.1} parent=0 // pred_check_branch
    %30 = sbr.rel (0) target = $region29
  $region28: #{mlp_value_forward.1} parent=0 // pred_region
    _
  $region29: #{mlp_value_forward.1} parent=0 // pred_fallthru
    _
  // Predicated region
  $region30: #{mlp_value_forward.1} parent=0 // pred_check
    _
  $region31: #{mlp_value_forward.1} parent=0 // pred_check_branch
    %32 = sbr.rel (0) target = $region33
  $region32: #{mlp_value_forward.1} parent=0 // pred_region
    _
  $region33: #{mlp_value_forward.1} parent=0 // pred_fallthru
    _
  // Predicated region
  $region34: #{mlp_value_forward.1} parent=0 // pred_check
    _
  $region35: #{mlp_value_forward.1} parent=0 // pred_check_branch
    %34 = sbr.rel (0) target = $region37
  $region36: #{mlp_value_forward.1} parent=0 // pred_region
    _
  $region37: #{mlp_value_forward.1} parent=0 // pred_fallthru
    _
  // Predicated region
  $region38: #{mlp_value_forward.1} parent=0 // pred_check
    _
  $region39: #{mlp_value_forward.1} parent=0 // pred_check_branch
    %36 = sbr.rel (0) target = $region41
  $region40: #{mlp_value_forward.1} parent=0 // pred_region
    _
  $region41: #{mlp_value_forward.1} parent=0 // pred_fallthru
    _
  // Predicated region
  $region42: #{mlp_value_forward.1} parent=0 // pred_check
    _
  $region43: #{mlp_value_forward.1} parent=0 // pred_check_branch
    %38 = sbr.rel (0) target = $region45
  $region44: #{mlp_value_forward.1} parent=0 // pred_region
    _
  $region45: #{mlp_value_forward.1} parent=0 // pred_fallthru
    _
  %v40 = vld [vmem:[%s0] sm:$0xff]
  %v41 = vpack.c.bf16 %v40, %v40
  %v42 = vld [vmem:[%s2] sm:$0xff]
  %v43 = vld [vmem:[%s2 + $0x8] sm:$0xff]
  %v44 = vld [vmem:[%s1] sm:$0xff]
  %v45 = vpack.c.bf16 %v44, %v44
  %v46 = vld [vmem:[%s3] sm:$0xff]
  %v48 = vunpack.c.l.b16 %v46
  %v49 = vunpack.c.h.b16 %v46
  %v50 = vpack.c.b16 %v48, %v48
  %v51 = vpack.c.b16 %v49, %v49
  %vm52 = vcmask 64512
  %v54 = vsel %vm52, %v45, 0
  %vm56 = vcmask 1043456
  %v58 = vsel %vm56, %v50, 0
  %v61 = vsel %vm56, %v51, 0
  %63 = vmatprep.subr.bf16.mxu0 %v61
  %64 = vmatpush1.bf16.msra.mxu0 %v58
  %65 = vmatprep.subr.bf16.mxu0 0
  %66 = vmatpush1.bf16.msra.mxu0 0
  %67 = vmatprep.subr.bf16.mxu0 0
  %68 = vmatpush1.bf16.msra.mxu0 0
  %69 = vmatprep.subr.bf16.mxu0 0
  %70 = vmatpush1.bf16.msra.mxu0 0
  %71 = vmatprep.subr.bf16.mxu0 0
  %72 = vmatpush1.bf16.msra.mxu0 0
  %73 = vmatprep.subr.bf16.mxu0 0
  %74 = vmatpush1.bf16.msra.mxu0 0
  %75 = vmatprep.subr.bf16.mxu0 0
  %76 = vmatpush1.bf16.msra.mxu0 0
  %77 = vmatprep.subr.bf16.mxu0 0
  %78 = vmatpush1.bf16.msra.mxu0 0
  %79 = vmatprep.subr.bf16.mxu0 0
  %80 = vmatpush1.bf16.msra.mxu0 0
  %81 = vmatprep.subr.bf16.mxu0 0
  %82 = vmatpush1.bf16.msra.mxu0 0
  %83 = vmatprep.subr.bf16.mxu0 0
  %84 = vmatpush1.bf16.msra.mxu0 0
  %85 = vmatprep.subr.bf16.mxu0 0
  %86 = vmatpush1.bf16.msra.mxu0 0
  %87 = vmatprep.subr.bf16.mxu0 0
  %88 = vmatpush1.bf16.msra.mxu0 0
  %89 = vmatprep.subr.bf16.mxu0 0
  %90 = vmatpush1.bf16.msra.mxu0 0
  %91 = vmatprep.subr.bf16.mxu0 0
  %92 = vmatpush1.bf16.msra.mxu0 0
  %93 = vmatprep.subr.bf16.mxu0 0
  %94 = vmatpush1.bf16.msra.mxu0 0
  %95 = vmatprep.mubr.bf16.mxu0 0
  %96 = vmatmul.mubr.bf16.gmra.mrb[0].mxu0 %v54
  %v97 = vpop.f32.mrb[0].mxu0
  %v98 = vadd.f32 0.0, %v97
  %v99 = vpop.f32.mrb[0].mxu0
  %v100 = vadd.f32 0.0, %v99
  %v101 = vpop.f32.mrb[0].mxu0
  %v102 = vpop.f32.mrb[0].mxu0
  %103 = vdwg.mxu0
  %v106 = vunpack.c.l.b16 %v42
  %v107 = vunpack.c.h.b16 %v42
  %v108 = vunpack.c.l.b16 %v43
  %v109 = vunpack.c.h.b16 %v43
  %v110 = vpack.c.b16 %v108, %v106
  %v111 = vpack.c.b16 %v109, %v107
  %vm114 = vcmask 130048
  %v116 = vsel %vm114, %v41, 0
  %118 = vmatprep.subr.bf16.mxu0 %v111
  %119 = vmatpush1.bf16.msra.mxu0 %v110
  %120 = vmatprep.subr.bf16.mxu0 0
  %121 = vmatpush1.bf16.msra.mxu0 0
  %122 = vmatprep.subr.bf16.mxu0 0
  %123 = vmatpush1.bf16.msra.mxu0 0
  %124 = vmatprep.subr.bf16.mxu0 0
  %125 = vmatpush1.bf16.msra.mxu0 0
  %126 = vmatprep.subr.bf16.mxu0 0
  %127 = vmatpush1.bf16.msra.mxu0 0
  %128 = vmatprep.subr.bf16.mxu0 0
  %129 = vmatpush1.bf16.msra.mxu0 0
  %130 = vmatprep.subr.bf16.mxu0 0
  %131 = vmatpush1.bf16.msra.mxu0 0
  %132 = vmatprep.subr.bf16.mxu0 0
  %133 = vmatpush1.bf16.msra.mxu0 0
  %134 = vmatprep.subr.bf16.mxu0 0
  %135 = vmatpush1.bf16.msra.mxu0 0
  %136 = vmatprep.subr.bf16.mxu0 0
  %137 = vmatpush1.bf16.msra.mxu0 0
  %138 = vmatprep.subr.bf16.mxu0 0
  %139 = vmatpush1.bf16.msra.mxu0 0
  %140 = vmatprep.subr.bf16.mxu0 0
  %141 = vmatpush1.bf16.msra.mxu0 0
  %142 = vmatprep.subr.bf16.mxu0 0
  %143 = vmatpush1.bf16.msra.mxu0 0
  %144 = vmatprep.subr.bf16.mxu0 0
  %145 = vmatpush1.bf16.msra.mxu0 0
  %146 = vmatprep.subr.bf16.mxu0 0
  %147 = vmatpush1.bf16.msra.mxu0 0
  %148 = vmatprep.subr.bf16.mxu0 0
  %149 = vmatpush1.bf16.msra.mxu0 0
  %150 = vmatprep.mubr.bf16.mxu0 0
  %151 = vmatmul.mubr.bf16.gmra.mrb[0].mxu0 %v116
  %v152 = vpop.f32.mrb[0].mxu0
  %v153 = vadd.f32 %v98, %v152
  %v154 = vpop.f32.mrb[0].mxu0
  %v155 = vadd.f32 %v100, %v154
  %v156 = vpop.f32.mrb[0].mxu0
  %v157 = vpop.f32.mrb[0].mxu0
  %158 = vdwg.mxu0
  %v159 = vld [vmem:[%s4] sm:$0x3]
  %v161 = vlaneseq
  %v162 = vshrl.u32 %v161, 7
  %v163 = vsub.s32 0, %v162
  %v164 = vrot.slane %v159, %v163
  %v165 = vlaneseq
  %v166 = vshrl.u32 %v165, 7
  %v167 = vsub.s32 1, %v166
  %v168 = vrot.slane %v159, %v167
  %v171 = vadd.f32 %v153, %v164
  %v172 = vadd.f32 %v155, %v168
  %v173 = vmax.f32 %v171, 0.0
  %v174 = vmax.f32 %v172, 0.0
  %v175 = vpack.c.bf16 %v173, %v173
  %v176 = vpack.c.bf16 %v174, %v174
  %v177 = vld [vmem:[%s5] sm:$0xff]
  %v178 = vld [vmem:[%s5 + $0x8] sm:$0xff]
  %v179 = vld [vmem:[%s5 + $0x10] sm:$0xff]
  %v180 = vld [vmem:[%s5 + $0x18] sm:$0xff]
  %v181 = vld [vmem:[%s5 + $0x20] sm:$0xff]
  %v182 = vld [vmem:[%s5 + $0x28] sm:$0xff]
  %v183 = vld [vmem:[%s5 + $0x30] sm:$0xff]
  %v184 = vld [vmem:[%s5 + $0x38] sm:$0xff]
  %v185 = vld [vmem:[%s5 + $0x40] sm:$0xff]
  %v186 = vld [vmem:[%s5 + $0x48] sm:$0xff]
  %v187 = vld [vmem:[%s5 + $0x50] sm:$0xff]
  %v188 = vld [vmem:[%s5 + $0x58] sm:$0xff]
  %v189 = vld [vmem:[%s5 + $0x60] sm:$0xff]
  %v190 = vld [vmem:[%s5 + $0x68] sm:$0xff]
  %v191 = vld [vmem:[%s5 + $0x70] sm:$0xff]
  %v192 = vld [vmem:[%s5 + $0x78] sm:$0xff]
  %v193 = vld [vmem:[%s5 + $0x80] sm:$0xff]
  %v194 = vld [vmem:[%s5 + $0x88] sm:$0xff]
  %v195 = vld [vmem:[%s5 + $0x90] sm:$0xff]
  %v196 = vld [vmem:[%s5 + $0x98] sm:$0xff]
  %v197 = vld [vmem:[%s5 + $0xa0] sm:$0xff]
  %v198 = vld [vmem:[%s5 + $0xa8] sm:$0xff]
  %v199 = vld [vmem:[%s5 + $0xb0] sm:$0xff]
  %v200 = vld [vmem:[%s5 + $0xb8] sm:$0xff]
  %v201 = vld [vmem:[%s5 + $0xc0] sm:$0xff]
  %v202 = vld [vmem:[%s5 + $0xc8] sm:$0xff]
  %v203 = vld [vmem:[%s5 + $0xd0] sm:$0xff]
  %v204 = vld [vmem:[%s5 + $0xd8] sm:$0xff]
  %v205 = vld [vmem:[%s5 + $0xe0] sm:$0xff]
  %v206 = vld [vmem:[%s5 + $0xe8] sm:$0xff]
  %v207 = vld [vmem:[%s5 + $0xf0] sm:$0xff]
  %v208 = vld [vmem:[%s5 + $0xf8] sm:$0xff]
  %v209 = vld [vmem:[%s6] sm:$0x3]
  %v211 = vlaneseq
  %v212 = vshrl.u32 %v211, 7
  %v213 = vsub.s32 0, %v212
  %v214 = vrot.slane %v209, %v213
  %v215 = vlaneseq
  %v216 = vshrl.u32 %v215, 7
  %v217 = vsub.s32 1, %v216
  %v218 = vrot.slane %v209, %v217
  %v253 = vunpack.c.l.b16 %v177
  %v254 = vunpack.c.h.b16 %v177
  %v255 = vunpack.c.l.b16 %v178
  %v256 = vunpack.c.h.b16 %v178
  %v257 = vunpack.c.l.b16 %v179
  %v258 = vunpack.c.h.b16 %v179
  %v259 = vunpack.c.l.b16 %v180
  %v260 = vunpack.c.h.b16 %v180
  %v261 = vunpack.c.l.b16 %v181
  %v262 = vunpack.c.h.b16 %v181
  %v263 = vunpack.c.l.b16 %v182
  %v264 = vunpack.c.h.b16 %v182
  %v265 = vunpack.c.l.b16 %v183
  %v266 = vunpack.c.h.b16 %v183
  %v267 = vunpack.c.l.b16 %v184
  %v268 = vunpack.c.h.b16 %v184
  %v269 = vunpack.c.l.b16 %v185
  %v270 = vunpack.c.h.b16 %v185
  %v271 = vunpack.c.l.b16 %v186
  %v272 = vunpack.c.h.b16 %v186
  %v273 = vunpack.c.l.b16 %v187
  %v274 = vunpack.c.h.b16 %v187
  %v275 = vunpack.c.l.b16 %v188
  %v276 = vunpack.c.h.b16 %v188
  %v277 = vunpack.c.l.b16 %v189
  %v278 = vunpack.c.h.b16 %v189
  %v279 = vunpack.c.l.b16 %v190
  %v280 = vunpack.c.h.b16 %v190
  %v281 = vunpack.c.l.b16 %v191
  %v282 = vunpack.c.h.b16 %v191
  %v283 = vunpack.c.l.b16 %v192
  %v284 = vunpack.c.h.b16 %v192
  %v285 = vunpack.c.l.b16 %v193
  %v286 = vunpack.c.h.b16 %v193
  %v287 = vunpack.c.l.b16 %v194
  %v288 = vunpack.c.h.b16 %v194
  %v289 = vunpack.c.l.b16 %v195
  %v290 = vunpack.c.h.b16 %v195
  %v291 = vunpack.c.l.b16 %v196
  %v292 = vunpack.c.h.b16 %v196
  %v293 = vunpack.c.l.b16 %v197
  %v294 = vunpack.c.h.b16 %v197
  %v295 = vunpack.c.l.b16 %v198
  %v296 = vunpack.c.h.b16 %v198
  %v297 = vunpack.c.l.b16 %v199
  %v298 = vunpack.c.h.b16 %v199
  %v299 = vunpack.c.l.b16 %v200
  %v300 = vunpack.c.h.b16 %v200
  %v301 = vunpack.c.l.b16 %v201
  %v302 = vunpack.c.h.b16 %v201
  %v303 = vunpack.c.l.b16 %v202
  %v304 = vunpack.c.h.b16 %v202
  %v305 = vunpack.c.l.b16 %v203
  %v306 = vunpack.c.h.b16 %v203
  %v307 = vunpack.c.l.b16 %v204
  %v308 = vunpack.c.h.b16 %v204
  %v309 = vunpack.c.l.b16 %v205
  %v310 = vunpack.c.h.b16 %v205
  %v311 = vunpack.c.l.b16 %v206
  %v312 = vunpack.c.h.b16 %v206
  %v313 = vunpack.c.l.b16 %v207
  %v314 = vunpack.c.h.b16 %v207
  %v315 = vunpack.c.l.b16 %v208
  %v316 = vunpack.c.h.b16 %v208
  %v317 = vpack.c.b16 %v255, %v253
  %v318 = vpack.c.b16 %v256, %v254
  %v319 = vpack.c.b16 %v259, %v257
  %v320 = vpack.c.b16 %v260, %v258
  %v321 = vpack.c.b16 %v263, %v261
  %v322 = vpack.c.b16 %v264, %v262
  %v323 = vpack.c.b16 %v267, %v265
  %v324 = vpack.c.b16 %v268, %v266
  %v325 = vpack.c.b16 %v271, %v269
  %v326 = vpack.c.b16 %v272, %v270
  %v327 = vpack.c.b16 %v275, %v273
  %v328 = vpack.c.b16 %v276, %v274
  %v329 = vpack.c.b16 %v279, %v277
  %v330 = vpack.c.b16 %v280, %v278
  %v331 = vpack.c.b16 %v283, %v281
  %v332 = vpack.c.b16 %v284, %v282
  %v333 = vpack.c.b16 %v287, %v285
  %v334 = vpack.c.b16 %v288, %v286
  %v335 = vpack.c.b16 %v291, %v289
  %v336 = vpack.c.b16 %v292, %v290
  %v337 = vpack.c.b16 %v295, %v293
  %v338 = vpack.c.b16 %v296, %v294
  %v339 = vpack.c.b16 %v299, %v297
  %v340 = vpack.c.b16 %v300, %v298
  %v341 = vpack.c.b16 %v303, %v301
  %v342 = vpack.c.b16 %v304, %v302
  %v343 = vpack.c.b16 %v307, %v305
  %v344 = vpack.c.b16 %v308, %v306
  %v345 = vpack.c.b16 %v311, %v309
  %v346 = vpack.c.b16 %v312, %v310
  %v347 = vpack.c.b16 %v315, %v313
  %v348 = vpack.c.b16 %v316, %v314
  %381 = vmatprep.subr.bf16.mxu0 %v318
  %382 = vmatpush1.bf16.msra.mxu0 %v317
  %383 = vmatprep.subr.bf16.mxu0 %v320
  %384 = vmatpush1.bf16.msra.mxu0 %v319
  %385 = vmatprep.subr.bf16.mxu0 %v322
  %386 = vmatpush1.bf16.msra.mxu0 %v321
  %387 = vmatprep.subr.bf16.mxu0 %v324
  %388 = vmatpush1.bf16.msra.mxu0 %v323
  %389 = vmatprep.subr.bf16.mxu0 %v326
  %390 = vmatpush1.bf16.msra.mxu0 %v325
  %391 = vmatprep.subr.bf16.mxu0 %v328
  %392 = vmatpush1.bf16.msra.mxu0 %v327
  %393 = vmatprep.subr.bf16.mxu0 %v330
  %394 = vmatpush1.bf16.msra.mxu0 %v329
  %395 = vmatprep.subr.bf16.mxu0 %v332
  %396 = vmatpush1.bf16.msra.mxu0 %v331
  %397 = vmatprep.subr.bf16.mxu0 %v334
  %398 = vmatpush1.bf16.msra.mxu0 %v333
  %399 = vmatprep.subr.bf16.mxu0 %v336
  %400 = vmatpush1.bf16.msra.mxu0 %v335
  %401 = vmatprep.subr.bf16.mxu0 %v338
  %402 = vmatpush1.bf16.msra.mxu0 %v337
  %403 = vmatprep.subr.bf16.mxu0 %v340
  %404 = vmatpush1.bf16.msra.mxu0 %v339
  %405 = vmatprep.subr.bf16.mxu0 %v342
  %406 = vmatpush1.bf16.msra.mxu0 %v341
  %407 = vmatprep.subr.bf16.mxu0 %v344
  %408 = vmatpush1.bf16.msra.mxu0 %v343
  %409 = vmatprep.subr.bf16.mxu0 %v346
  %410 = vmatpush1.bf16.msra.mxu0 %v345
  %411 = vmatprep.subr.bf16.mxu0 %v348
  %412 = vmatpush1.bf16.msra.mxu0 %v347
  %413 = vmatprep.mubr.bf16.mxu0 %v176
  %414 = vmatmul.mubr.bf16.gmra.mrb[0].mxu0 %v175
  %v415 = vpop.f32.mrb[0].mxu0
  %v416 = vadd.f32 %v214, %v415
  %v417 = vpop.f32.mrb[0].mxu0
  %v418 = vadd.f32 %v218, %v417
  %v419 = vpop.f32.mrb[0].mxu0
  %v420 = vpop.f32.mrb[0].mxu0
  %421 = vdwg.mxu0
  %v422 = vmax.f32 %v416, 0.0
  %v423 = vmax.f32 %v418, 0.0
  %v424 = vpack.c.bf16 %v422, %v422
  %v425 = vpack.c.bf16 %v423, %v423
  %v426 = vld [vmem:[%s7] sm:$0xff]
  %v427 = vld [vmem:[%s7 + $0x8] sm:$0xff]
  %v428 = vld [vmem:[%s7 + $0x10] sm:$0xff]
  %v429 = vld [vmem:[%s7 + $0x18] sm:$0xff]
  %v430 = vld [vmem:[%s7 + $0x20] sm:$0xff]
  %v431 = vld [vmem:[%s7 + $0x28] sm:$0xff]
  %v432 = vld [vmem:[%s7 + $0x30] sm:$0xff]
  %v433 = vld [vmem:[%s7 + $0x38] sm:$0xff]
  %v434 = vld [vmem:[%s7 + $0x40] sm:$0xff]
  %v435 = vld [vmem:[%s7 + $0x48] sm:$0xff]
  %v436 = vld [vmem:[%s7 + $0x50] sm:$0xff]
  %v437 = vld [vmem:[%s7 + $0x58] sm:$0xff]
  %v438 = vld [vmem:[%s7 + $0x60] sm:$0xff]
  %v439 = vld [vmem:[%s7 + $0x68] sm:$0xff]
  %v440 = vld [vmem:[%s7 + $0x70] sm:$0xff]
  %v441 = vld [vmem:[%s7 + $0x78] sm:$0xff]
  %v442 = vld [vmem:[%s7 + $0x80] sm:$0xff]
  %v443 = vld [vmem:[%s7 + $0x88] sm:$0xff]
  %v444 = vld [vmem:[%s7 + $0x90] sm:$0xff]
  %v445 = vld [vmem:[%s7 + $0x98] sm:$0xff]
  %v446 = vld [vmem:[%s7 + $0xa0] sm:$0xff]
  %v447 = vld [vmem:[%s7 + $0xa8] sm:$0xff]
  %v448 = vld [vmem:[%s7 + $0xb0] sm:$0xff]
  %v449 = vld [vmem:[%s7 + $0xb8] sm:$0xff]
  %v450 = vld [vmem:[%s7 + $0xc0] sm:$0xff]
  %v451 = vld [vmem:[%s7 + $0xc8] sm:$0xff]
  %v452 = vld [vmem:[%s7 + $0xd0] sm:$0xff]
  %v453 = vld [vmem:[%s7 + $0xd8] sm:$0xff]
  %v454 = vld [vmem:[%s7 + $0xe0] sm:$0xff]
  %v455 = vld [vmem:[%s7 + $0xe8] sm:$0xff]
  %v456 = vld [vmem:[%s7 + $0xf0] sm:$0xff]
  %v457 = vld [vmem:[%s7 + $0xf8] sm:$0xff]
  %v458 = vld [vmem:[%s8] sm:$0x3]
  %v460 = vlaneseq
  %v461 = vshrl.u32 %v460, 7
  %v462 = vsub.s32 0, %v461
  %v463 = vrot.slane %v458, %v462
  %v464 = vlaneseq
  %v465 = vshrl.u32 %v464, 7
  %v466 = vsub.s32 1, %v465
  %v467 = vrot.slane %v458, %v466
  %v502 = vunpack.c.l.b16 %v426
  %v503 = vunpack.c.h.b16 %v426
  %v504 = vunpack.c.l.b16 %v427
  %v505 = vunpack.c.h.b16 %v427
  %v506 = vunpack.c.l.b16 %v428
  %v507 = vunpack.c.h.b16 %v428
  %v508 = vunpack.c.l.b16 %v429
  %v509 = vunpack.c.h.b16 %v429
  %v510 = vunpack.c.l.b16 %v430
  %v511 = vunpack.c.h.b16 %v430
  %v512 = vunpack.c.l.b16 %v431
  %v513 = vunpack.c.h.b16 %v431
  %v514 = vunpack.c.l.b16 %v432
  %v515 = vunpack.c.h.b16 %v432
  %v516 = vunpack.c.l.b16 %v433
  %v517 = vunpack.c.h.b16 %v433
  %v518 = vunpack.c.l.b16 %v434
  %v519 = vunpack.c.h.b16 %v434
  %v520 = vunpack.c.l.b16 %v435
  %v521 = vunpack.c.h.b16 %v435
  %v522 = vunpack.c.l.b16 %v436
  %v523 = vunpack.c.h.b16 %v436
  %v524 = vunpack.c.l.b16 %v437
  %v525 = vunpack.c.h.b16 %v437
  %v526 = vunpack.c.l.b16 %v438
  %v527 = vunpack.c.h.b16 %v438
  %v528 = vunpack.c.l.b16 %v439
  %v529 = vunpack.c.h.b16 %v439
  %v530 = vunpack.c.l.b16 %v440
  %v531 = vunpack.c.h.b16 %v440
  %v532 = vunpack.c.l.b16 %v441
  %v533 = vunpack.c.h.b16 %v441
  %v534 = vunpack.c.l.b16 %v442
  %v535 = vunpack.c.h.b16 %v442
  %v536 = vunpack.c.l.b16 %v443
  %v537 = vunpack.c.h.b16 %v443
  %v538 = vunpack.c.l.b16 %v444
  %v539 = vunpack.c.h.b16 %v444
  %v540 = vunpack.c.l.b16 %v445
  %v541 = vunpack.c.h.b16 %v445
  %v542 = vunpack.c.l.b16 %v446
  %v543 = vunpack.c.h.b16 %v446
  %v544 = vunpack.c.l.b16 %v447
  %v545 = vunpack.c.h.b16 %v447
  %v546 = vunpack.c.l.b16 %v448
  %v547 = vunpack.c.h.b16 %v448
  %v548 = vunpack.c.l.b16 %v449
  %v549 = vunpack.c.h.b16 %v449
  %v550 = vunpack.c.l.b16 %v450
  %v551 = vunpack.c.h.b16 %v450
  %v552 = vunpack.c.l.b16 %v451
  %v553 = vunpack.c.h.b16 %v451
  %v554 = vunpack.c.l.b16 %v452
  %v555 = vunpack.c.h.b16 %v452
  %v556 = vunpack.c.l.b16 %v453
  %v557 = vunpack.c.h.b16 %v453
  %v558 = vunpack.c.l.b16 %v454
  %v559 = vunpack.c.h.b16 %v454
  %v560 = vunpack.c.l.b16 %v455
  %v561 = vunpack.c.h.b16 %v455
  %v562 = vunpack.c.l.b16 %v456
  %v563 = vunpack.c.h.b16 %v456
  %v564 = vunpack.c.l.b16 %v457
  %v565 = vunpack.c.h.b16 %v457
  %v566 = vpack.c.b16 %v504, %v502
  %v567 = vpack.c.b16 %v505, %v503
  %v568 = vpack.c.b16 %v508, %v506
  %v569 = vpack.c.b16 %v509, %v507
  %v570 = vpack.c.b16 %v512, %v510
  %v571 = vpack.c.b16 %v513, %v511
  %v572 = vpack.c.b16 %v516, %v514
  %v573 = vpack.c.b16 %v517, %v515
  %v574 = vpack.c.b16 %v520, %v518
  %v575 = vpack.c.b16 %v521, %v519
  %v576 = vpack.c.b16 %v524, %v522
  %v577 = vpack.c.b16 %v525, %v523
  %v578 = vpack.c.b16 %v528, %v526
  %v579 = vpack.c.b16 %v529, %v527
  %v580 = vpack.c.b16 %v532, %v530
  %v581 = vpack.c.b16 %v533, %v531
  %v582 = vpack.c.b16 %v536, %v534
  %v583 = vpack.c.b16 %v537, %v535
  %v584 = vpack.c.b16 %v540, %v538
  %v585 = vpack.c.b16 %v541, %v539
  %v586 = vpack.c.b16 %v544, %v542
  %v587 = vpack.c.b16 %v545, %v543
  %v588 = vpack.c.b16 %v548, %v546
  %v589 = vpack.c.b16 %v549, %v547
  %v590 = vpack.c.b16 %v552, %v550
  %v591 = vpack.c.b16 %v553, %v551
  %v592 = vpack.c.b16 %v556, %v554
  %v593 = vpack.c.b16 %v557, %v555
  %v594 = vpack.c.b16 %v560, %v558
  %v595 = vpack.c.b16 %v561, %v559
  %v596 = vpack.c.b16 %v564, %v562
  %v597 = vpack.c.b16 %v565, %v563
  %630 = vmatprep.subr.bf16.mxu0 %v567
  %631 = vmatpush1.bf16.msra.mxu0 %v566
  %632 = vmatprep.subr.bf16.mxu0 %v569
  %633 = vmatpush1.bf16.msra.mxu0 %v568
  %634 = vmatprep.subr.bf16.mxu0 %v571
  %635 = vmatpush1.bf16.msra.mxu0 %v570
  %636 = vmatprep.subr.bf16.mxu0 %v573
  %637 = vmatpush1.bf16.msra.mxu0 %v572
  %638 = vmatprep.subr.bf16.mxu0 %v575
  %639 = vmatpush1.bf16.msra.mxu0 %v574
  %640 = vmatprep.subr.bf16.mxu0 %v577
  %641 = vmatpush1.bf16.msra.mxu0 %v576
  %642 = vmatprep.subr.bf16.mxu0 %v579
  %643 = vmatpush1.bf16.msra.mxu0 %v578
  %644 = vmatprep.subr.bf16.mxu0 %v581
  %645 = vmatpush1.bf16.msra.mxu0 %v580
  %646 = vmatprep.subr.bf16.mxu0 %v583
  %647 = vmatpush1.bf16.msra.mxu0 %v582
  %648 = vmatprep.subr.bf16.mxu0 %v585
  %649 = vmatpush1.bf16.msra.mxu0 %v584
  %650 = vmatprep.subr.bf16.mxu0 %v587
  %651 = vmatpush1.bf16.msra.mxu0 %v586
  %652 = vmatprep.subr.bf16.mxu0 %v589
  %653 = vmatpush1.bf16.msra.mxu0 %v588
  %654 = vmatprep.subr.bf16.mxu0 %v591
  %655 = vmatpush1.bf16.msra.mxu0 %v590
  %656 = vmatprep.subr.bf16.mxu0 %v593
  %657 = vmatpush1.bf16.msra.mxu0 %v592
  %658 = vmatprep.subr.bf16.mxu0 %v595
  %659 = vmatpush1.bf16.msra.mxu0 %v594
  %660 = vmatprep.subr.bf16.mxu0 %v597
  %661 = vmatpush1.bf16.msra.mxu0 %v596
  %662 = vmatprep.mubr.bf16.mxu0 %v425
  %663 = vmatmul.mubr.bf16.gmra.mrb[0].mxu0 %v424
  %v664 = vpop.f32.mrb[0].mxu0
  %v665 = vadd.f32 %v463, %v664
  %v666 = vpop.f32.mrb[0].mxu0
  %v667 = vadd.f32 %v467, %v666
  %v668 = vpop.f32.mrb[0].mxu0
  %v669 = vpop.f32.mrb[0].mxu0
  %670 = vdwg.mxu0
  %v671 = vmax.f32 %v665, 0.0
  %v672 = vmax.f32 %v667, 0.0
  %v673 = vld [vmem:[%s9] sm:$0x3]
  %v675 = vlaneseq
  %v676 = vshrl.u32 %v675, 7
  %v677 = vsub.s32 0, %v676
  %v678 = vrot.slane %v673, %v677
  %v679 = vlaneseq
  %v680 = vshrl.u32 %v679, 7
  %v681 = vsub.s32 1, %v680
  %v682 = vrot.slane %v673, %v681
  %v685 = vmul.f32 %v671, %v678
  %v686 = vmul.f32 %v672, %v682
  %v687 = vadd.f32 %v685, %v686
  %688 = vadd.xlane.f32.xlu0 %v687
  %v689 = vpop.xlane.xlu0 %688
  %s690 = sld [smem:[#allocation2]]
  %v691 = vstv %s690
  %v692 = vadd.f32 %v689, %v691
  %vm693 = vcmask 7168
  %694 = vst.msk [vmem:[%s11] sm:$0xff] %vm693, %v692
  // Predicated region
  $region46: #{mlp_value_forward.1} parent=0 // pred_check
    _
  $region47: #{mlp_value_forward.1} parent=0 // pred_check_branch
    %696 = sbr.rel (0) target = $region49
  $region48: #{mlp_value_forward.1} parent=0 // pred_region
    _
  $region49: #{mlp_value_forward.1} parent=0 // pred_fallthru
    _
  // Predicated region
  $region50: #{mlp_value_forward.1} parent=0 // pred_check
    _
  $region51: #{mlp_value_forward.1} parent=0 // pred_check_branch
    %698 = sbr.rel (0) target = $region53
  $region52: #{mlp_value_forward.1} parent=0 // pred_region
    _
  $region53: #{mlp_value_forward.1} parent=0 // pred_fallthru
    _

</llo_original>
